<compile_context>
chip_gen: v5e
topology: v5e:2x2
jax: 0.10.0
libtpu: 0.0.40
codegen_flags: <defaults>
</compile_context>

<pallas_src>
import functools

import jax
import jax.numpy as jnp
from jax.experimental import pallas as pl
from jax.experimental.pallas import tpu as pltpu

EPS = 1e-5


# ----------------------------------------------------------------------------
# chip-aware configuration
# ----------------------------------------------------------------------------
def _device_kind():
    try:
        return jax.devices()[0].device_kind.lower()
    except Exception:
        return ""


@functools.lru_cache(maxsize=None)
def _is_v5e():
    k = _device_kind()
    return ("v5 lite" in k) or ("v5e" in k) or ("v5litepod" in k)


@functools.lru_cache(maxsize=None)
def _vmem_capacity_bytes():
    try:
        return int(pltpu.get_tpu_info().vmem_capacity_bytes)
    except Exception:
        # v7x has 64 MiB per TensorCore; v5e/v6e (and older) have 128 MiB.
        return (64 << 20) if "v7" in _device_kind() else (128 << 20)


def _vmem_budget():
    # Leave headroom for the compiler's own scratch / double-buffer slack.
    return int(min(0.55 * _vmem_capacity_bytes(), 64 << 20))


def _feature_lane():
    # v6e/v7x MXU is 256x256 -> pad features to 256 so N/K tiles feed the full
    # systolic array; v5e has 4x 128x128 MXUs -> 128 is enough.
    return 128 if _is_v5e() else 256


# ----------------------------------------------------------------------------
# helpers
# ----------------------------------------------------------------------------
def _round_up(x, m):
    return ((x + m - 1) // m) * m


def _pad2(a, rows, cols):
    return jnp.pad(a, ((0, rows - a.shape[0]), (0, cols - a.shape[1])))


def _full_spec(shape):
    # whole-array block (single grid cell); legal because block == array dims
    return pl.BlockSpec(shape, lambda: tuple(0 for _ in shape))


def _tile_candidates(p, max_t):
    c = [t for t in (1024, 512, 256, 128) if t <= max_t and p % t == 0]
    return c if c else [p]


# ----------------------------------------------------------------------------
# parameter preparation (pad + cast ONCE, not per forward call)
# ----------------------------------------------------------------------------
def prepare_mlp_params(params, input_dim, num_layers):
    """Pad feature dims to the MXU-friendly multiple and cast matmul operands
    to bf16 once.  The returned dict is what mlp_forward consumes."""
    lane = _feature_lane()
    linears = params["linears"]
    bns = params["bn"]
    dims = [input_dim] + [w.shape[1] for (w, _) in linears]
    pdims = [_round_up(d, lane) for d in dims]
    lin_p, bn_p = [], []
    for l in range(num_layers):
        w, b = linears[l]
        lin_p.append((_pad2(w, pdims[l], pdims[l + 1]).astype(jnp.bfloat16),
                      _pad2(b, 1, pdims[l + 1]).astype(jnp.float32)))
        if l < num_layers - 1:
            g, beta = bns[l]
            bn_p.append((_pad2(g, 1, pdims[l + 1]).astype(jnp.float32),
                         _pad2(beta, 1, pdims[l + 1]).astype(jnp.float32)))
    return {"lin": lin_p, "bn": bn_p, "dims": dims, "pdims": pdims,
            "num_layers": num_layers}


# ----------------------------------------------------------------------------
# fused whole-MLP kernel (small / mid problems: everything fits in VMEM)
# ----------------------------------------------------------------------------
def _make_fused_mlp_kernel(num_layers, n_valid):
    def kernel(*refs):
        x_ref = refs[0]
        o_ref = refs[-1]
        p = refs[1:-1]
        n_pad = x_ref.shape[0]
        inv_n = jnp.float32(1.0 / n_valid)

        h = x_ref[...]                      # bf16, lane-dense padded
        i = 0
        for layer in range(num_layers):
            w = p[i][...]                   # bf16 [in_pad, out_pad]
            b = p[i + 1][...]               # f32  [1, out_pad]
            y = jnp.dot(h, w, preferred_element_type=jnp.float32) + b
            if layer < num_layers - 1:
                g = p[i + 2][...]
                beta = p[i + 3][...]
                i += 4
                # one-pass batch stats (mask padded batch rows if any)
                if n_valid < n_pad:
                    row_mask = (jax.lax.broadcasted_iota(
                        jnp.int32, (n_pad, 1), 0) < n_valid)
                    ym = jnp.where(row_mask, y, 0.0)
                else:
                    ym = y
                s1 = jnp.sum(ym, axis=0, keepdims=True)
                s2 = jnp.sum(ym * ym, axis=0, keepdims=True)
                mean = s1 * inv_n
                var = jnp.maximum(s2 * inv_n - mean * mean, 0.0)
                scale = g * jax.lax.rsqrt(var + EPS)
                shift = beta - mean * scale
                h = jnp.maximum(y * scale + shift, 0.0).astype(jnp.bfloat16)
            else:
                i += 2
                o_ref[...] = y              # f32 output
    return kernel


def _fused_vmem_estimate(pdims, n_pad, num_layers):
    pmax = max(pdims)
    bts = 2 * n_pad * pdims[0] * 2 + 2 * n_pad * pdims[-1] * 4        # x, out
    bts += 2 * sum(pdims[l] * pdims[l + 1] * 2 for l in range(num_layers))
    bts += 16 * pmax * 4 * num_layers                                 # vectors
    bts += 3 * n_pad * pmax * 4                                       # live h/y
    return bts


def _mlp_forward_fused(prep, x):
    num_layers = prep["num_layers"]
    dims, pdims = prep["dims"], prep["pdims"]
    N = x.shape[0]
    n_pad = _round_up(N, 8)
    x_pad = _pad2(x, n_pad, pdims[0]).astype(jnp.bfloat16)

    args = [x_pad]
    specs = [_full_spec(x_pad.shape)]
    for l in range(num_layers):
        w, b = prep["lin"][l]
        args += [w, b]
        specs += [_full_spec(w.shape), _full_spec(b.shape)]
        if l < num_layers - 1:
            g, beta = prep["bn"][l]
            args += [g, beta]
            specs += [_full_spec(g.shape), _full_spec(beta.shape)]

    est = _fused_vmem_estimate(pdims, n_pad, num_layers)
    vmem_limit = int(min(_vmem_budget(), max(32 << 20, est + (8 << 20))))
    out = pl.pallas_call(
        _make_fused_mlp_kernel(num_layers, N),
        out_shape=jax.ShapeDtypeStruct((n_pad, pdims[-1]), jnp.float32),
        in_specs=specs,
        out_specs=_full_spec((n_pad, pdims[-1])),
        compiler_params=pltpu.CompilerParams(vmem_limit_bytes=vmem_limit),
    )(*args)
    return out[:N, :dims[-1]]


# ----------------------------------------------------------------------------
# tiled plain linear (final layer, large problems)
# ----------------------------------------------------------------------------
def _linear_tiled_kernel(x_ref, w_ref, b_ref, o_ref, acc_ref):
    k = pl.program_id(2)

    @pl.when(k == 0)
    def _():
        acc_ref[...] = jnp.zeros_like(acc_ref)

    acc_ref[...] += jnp.dot(x_ref[...], w_ref[...],
                            preferred_element_type=jnp.float32)

    @pl.when(k == pl.num_programs(2) - 1)
    def _():
        o_ref[...] = (acc_ref[...] + b_ref[...]).astype(o_ref.dtype)


def _linear_tiled(x, w, b):
    M, K = x.shape
    _, O = w.shape
    budget = _vmem_budget()
    tm = M if M <= 512 else 512                    # caller padded M to match
    tn = _tile_candidates(O, 512)[0]               # big tiles -> ~256 FLOP/byte
    tk = _tile_candidates(K, 1024)[0]
    wbufs = 3 if _is_v5e() else 2                  # deeper weight buffering v5e
    while True:
        est = (2 * tm * tk * 2 + wbufs * tk * tn * 2 + 2 * tm * tn * 4
               + tm * tn * 4 + 2 * tn * 4)
        if est <= budget or (tk <= 128 and tn <= 128):
            break
        if tk > 128:
            tk = _tile_candidates(K, tk // 2)[0]
        elif tn > 128:
            tn = _tile_candidates(O, tn // 2)[0]
    vmem_limit = int(min(budget, max(32 << 20, est + (4 << 20))))

    if _is_v5e():
        # hide v5e's longer DMA latency behind a third weight buffer
        w_spec = pl.BlockSpec((tk, tn), lambda i, j, k: (k, j),
                              pipeline_mode=pl.Buffered(3))
    else:
        w_spec = pl.BlockSpec((tk, tn), lambda i, j, k: (k, j))

    grid = (M // tm, O // tn, K // tk)
    return pl.pallas_call(
        _linear_tiled_kernel,
        out_shape=jax.ShapeDtypeStruct((M, O), jnp.float32),
        grid_spec=pltpu.PrefetchScalarGridSpec(
            num_scalar_prefetch=0,
            grid=grid,
            in_specs=[pl.BlockSpec((tm, tk), lambda i, j, k: (i, k)),
                      w_spec,
                      pl.BlockSpec((1, tn), lambda i, j, k: (0, j))],
            out_specs=pl.BlockSpec((tm, tn), lambda i, j, k: (i, j)),
            scratch_shapes=[pltpu.VMEM((tm, tn), jnp.float32)]),
        compiler_params=pltpu.CompilerParams(
            dimension_semantics=("parallel", "parallel", "arbitrary"),
            vmem_limit_bytes=vmem_limit),
    )(x, w, b)


# ----------------------------------------------------------------------------
# tiled linear + BatchNorm + ReLU (hidden layers, large problems)
# ----------------------------------------------------------------------------
def _make_linear_bn_relu_xres_kernel(n_valid):
    # x stays resident in VMEM (constant index_map -> DMA'd once); only the
    # weight / bias / gamma / beta tiles stream over the H grid axis.
    def kernel(x_ref, w_ref, b_ref, g_ref, bt_ref, o_ref):
        y = jnp.dot(x_ref[...], w_ref[...],
                    preferred_element_type=jnp.float32) + b_ref[...]
        n_pad = y.shape[0]
        inv_n = jnp.float32(1.0 / n_valid)
        if n_valid < n_pad:
            row_mask = (jax.lax.broadcasted_iota(
                jnp.int32, (n_pad, 1), 0) < n_valid)
            ym = jnp.where(row_mask, y, 0.0)
        else:
            ym = y
        s1 = jnp.sum(ym, axis=0, keepdims=True)
        s2 = jnp.sum(ym * ym, axis=0, keepdims=True)
        mean = s1 * inv_n
        var = jnp.maximum(s2 * inv_n - mean * mean, 0.0)
        scale = g_ref[...] * jax.lax.rsqrt(var + EPS)
        shift = bt_ref[...] - mean * scale
        o_ref[...] = jnp.maximum(y * scale + shift, 0.0).astype(o_ref.dtype)
    return kernel


def _make_linear_bn_relu_kstream_kernel(n_valid):
    # Fallback for batches whose full activation block doesn't fit VMEM:
    # stream x over K, accumulate in an f32 scratch, BN+ReLU on the last K step.
    def kernel(x_ref, w_ref, b_ref, g_ref, bt_ref, o_ref, acc_ref):
        k = pl.program_id(1)

        @pl.when(k == 0)
        def _():
            acc_ref[...] = jnp.zeros_like(acc_ref)

        acc_ref[...] += jnp.dot(x_ref[...], w_ref[...],
                                preferred_element_type=jnp.float32)

        @pl.when(k == pl.num_programs(1) - 1)
        def _():
            y = acc_ref[...] + b_ref[...]
            n_pad = y.shape[0]
            inv_n = jnp.float32(1.0 / n_valid)
            if n_valid < n_pad:
                row_mask = (jax.lax.broadcasted_iota(
                    jnp.int32, (n_pad, 1), 0) < n_valid)
                ym = jnp.where(row_mask, y, 0.0)
            else:
                ym = y
            s1 = jnp.sum(ym, axis=0, keepdims=True)
            s2 = jnp.sum(ym * ym, axis=0, keepdims=True)
            mean = s1 * inv_n
            var = jnp.maximum(s2 * inv_n - mean * mean, 0.0)
            scale = g_ref[...] * jax.lax.rsqrt(var + EPS)
            shift = bt_ref[...] - mean * scale
            o_ref[...] = jnp.maximum(y * scale + shift, 0.0).astype(o_ref.dtype)
    return kernel


def _linear_bn_relu_tiled(x, w, b, g, beta, *, n_valid, force_kernel=None):
    M, K = x.shape
    _, H = w.shape
    budget = _vmem_budget()

    # Preferred path: full x resident in VMEM, grid only over H tiles.
    tn = _tile_candidates(H, 512)[0]
    while True:
        est_x = (2 * M * K * 2 + 2 * K * tn * 2 + 2 * M * tn * 2
                 + 2 * M * tn * 4 + 6 * tn * 4)
        if est_x <= budget or tn <= 128:
            break
        tn = _tile_candidates(H, tn // 2)[0]
    use_xres = est_x <= budget
    if force_kernel == "xres":
        use_xres = True
    elif force_kernel == "kstream":
        use_xres = False

    if use_xres:
        vmem_limit = int(min(budget, max(32 << 20, est_x + (4 << 20))))
        return pl.pallas_call(
            _make_linear_bn_relu_xres_kernel(n_valid),
            out_shape=jax.ShapeDtypeStruct((M, H), jnp.bfloat16),
            grid_spec=pltpu.PrefetchScalarGridSpec(
                num_scalar_prefetch=0,
                grid=(H // tn,),
                in_specs=[pl.BlockSpec((M, K), lambda j: (0, 0)),    # resident
                          pl.BlockSpec((K, tn), lambda j: (0, j)),
                          pl.BlockSpec((1, tn), lambda j: (0, j)),
                          pl.BlockSpec((1, tn), lambda j: (0, j)),
                          pl.BlockSpec((1, tn), lambda j: (0, j))],
                out_specs=pl.BlockSpec((M, tn), lambda j: (0, j))),
            compiler_params=pltpu.CompilerParams(
                dimension_semantics=("parallel",),
                vmem_limit_bytes=vmem_limit),
        )(x, w, b, g, beta)

    # K-streamed fallback (full batch per block so stats stay exact); tiles
    # shrink chip-aware so the working set stays inside the VMEM budget.
    # TODO(synk): for batches where even minimum tiles exceed VMEM (v7x,
    # M >~ 10K rows) switch to split-statistics M-tiling (two-pass BN).
    tn = _tile_candidates(H, 256)[0]
    tk = _tile_candidates(K, 512)[0]
    while True:
        est = (2 * M * tk * 2 + 2 * tk * tn * 2 + 2 * M * tn * 2
               + 2 * M * tn * 4 + 6 * tn * 4)
        if est <= budget or (tk <= 128 and tn <= 128):
            break
        if tk > 128:
            tk = _tile_candidates(K, tk // 2)[0]
        elif tn > 128:
            tn = _tile_candidates(H, tn // 2)[0]
    vmem_limit = int(min(budget, max(32 << 20, est + (4 << 20))))
    return pl.pallas_call(
        _make_linear_bn_relu_kstream_kernel(n_valid),
        out_shape=jax.ShapeDtypeStruct((M, H), jnp.bfloat16),
        grid_spec=pltpu.PrefetchScalarGridSpec(
            num_scalar_prefetch=0,
            grid=(H // tn, K // tk),   # reduction (K) last
            in_specs=[pl.BlockSpec((M, tk), lambda j, k: (0, k)),
                      pl.BlockSpec((tk, tn), lambda j, k: (k, j)),
                      pl.BlockSpec((1, tn), lambda j, k: (0, j)),
                      pl.BlockSpec((1, tn), lambda j, k: (0, j)),
                      pl.BlockSpec((1, tn), lambda j, k: (0, j))],
            out_specs=pl.BlockSpec((M, tn), lambda j, k: (0, j)),
            scratch_shapes=[pltpu.VMEM((M, tn), jnp.float32)]),
        compiler_params=pltpu.CompilerParams(
            dimension_semantics=("parallel", "arbitrary"),
            vmem_limit_bytes=vmem_limit),
    )(x, w, b, g, beta)


def _mlp_forward_tiled(prep, x, force_bn_kernel=None):
    num_layers = prep["num_layers"]
    dims, pdims = prep["dims"], prep["pdims"]
    N = x.shape[0]
    n_pad = _round_up(N, 8) if N <= 512 else _round_up(N, 512)
    h = _pad2(x, n_pad, pdims[0]).astype(jnp.bfloat16)
    for l in range(num_layers - 1):
        w, b = prep["lin"][l]
        g, beta = prep["bn"][l]
        h = _linear_bn_relu_tiled(h, w, b, g, beta, n_valid=N,
                                  force_kernel=force_bn_kernel)
    w, b = prep["lin"][num_layers - 1]
    out = _linear_tiled(h, w, b)
    return out[:N, :dims[-1]]


# ----------------------------------------------------------------------------
# top level
# ----------------------------------------------------------------------------
def mlp_forward(prep, x, force_path=None, force_bn_kernel=None):
    if force_path == "fused":
        return _mlp_forward_fused(prep, x)
    if force_path == "tiled":
        return _mlp_forward_tiled(prep, x, force_bn_kernel)
    # Fuse the whole MLP into one kernel whenever the padded problem fits the
    # per-chip VMEM budget: keeps h in VMEM, single launch, no HBM round trips.
    n_pad = _round_up(x.shape[0], 8)
    est = _fused_vmem_estimate(prep["pdims"], n_pad, prep["num_layers"])
    if est <= min(_vmem_budget(), 40 << 20):
        return _mlp_forward_fused(prep, x)
    return _mlp_forward_tiled(prep, x, force_bn_kernel)


def init_mlp_params(key, num_layers, input_dim, hidden_dim, output_dim):
    """Deterministic params mimicking PyTorch nn.Linear init shapes.
    Weights stored as [in_dim, out_dim] (transpose of PyTorch's [out, in])."""
    if num_layers < 1:
        raise ValueError("number of layers should be positive!")
    params = {"linears": [], "bn": []}
    if num_layers == 1:
        dims = [(input_dim, output_dim)]
    else:
        dims = [(input_dim, hidden_dim)]
        dims += [(hidden_dim, hidden_dim)] * (num_layers - 2)
        dims += [(hidden_dim, output_dim)]
    for fan_in, fan_out in dims:
        key, kw, kb = jax.random.split(key, 3)
        bound = 1.0 / (fan_in ** 0.5)
        w = jax.random.uniform(kw, (fan_in, fan_out), jnp.float32, -bound, bound)
        b = jax.random.uniform(kb, (1, fan_out), jnp.float32, -bound, bound)
        params["linears"].append((w, b))
    if num_layers > 1:
        for _ in range(num_layers - 1):
            params["bn"].append((jnp.ones((1, hidden_dim), jnp.float32),
                                 jnp.zeros((1, hidden_dim), jnp.float32)))
    return params


def mlp_reference(params, x, num_layers):
    """Pure-JAX f32 reference with the module's semantics."""
    if num_layers == 1:
        w, b = params["linears"][0]
        return x @ w + b
    h = x
    for layer in range(num_layers - 1):
        w, b = params["linears"][layer]
        g, beta = params["bn"][layer]
        y = h @ w + b
        mean = jnp.mean(y, axis=0, keepdims=True)
        var = jnp.mean((y - mean) ** 2, axis=0, keepdims=True)
        y = (y - mean) / jnp.sqrt(var + EPS) * g + beta
        h = jnp.maximum(y, 0.0)
    w, b = params["linears"][num_layers - 1]
    return h @ w + b


if __name__ == "__main__":
    # --- test 1: module's small shapes -> fused single-kernel path ---
    num_layers, input_dim, hidden_dim, output_dim = 3, 16, 32, 8
    batch = 8
    key = jax.random.PRNGKey(0)
    key, kx = jax.random.split(key)
    x = jax.random.normal(kx, (batch, input_dim), jnp.float32)
    params = init_mlp_params(key, num_layers, input_dim, hidden_dim, output_dim)
    prep = prepare_mlp_params(params, input_dim, num_layers)

    out = jax.block_until_ready(mlp_forward(prep, x))
    ref = mlp_reference(params, x, num_layers)
    assert out.shape == (batch, output_dim)
    # bf16 MXU inputs -> compare against f32 reference with bf16-level tol
    assert jnp.allclose(out, ref, atol=5e-2, rtol=5e-2), "fused path mismatch"

    # --- test 2: larger shapes -> tiled path (x-resident BN kernel) ---
    n2, d_in2, d_h2, d_out2, L2 = 256, 192, 384, 96, 3
    key2 = jax.random.PRNGKey(0)
    key2, kx2 = jax.random.split(key2)
    x2 = jax.random.normal(kx2, (n2, d_in2), jnp.float32)
    params2 = init_mlp_params(key2, L2, d_in2, d_h2, d_out2)
    prep2 = prepare_mlp_params(params2, d_in2, L2)
    out2 = jax.block_until_ready(mlp_forward(prep2, x2, force_path="tiled"))
    ref2 = mlp_reference(params2, x2, L2)
    assert out2.shape == (n2, d_out2)
    assert jnp.allclose(out2, ref2, atol=5e-2, rtol=5e-2), "tiled(xres) mismatch"

    # --- test 3: force the K-streamed BN fallback (large-batch path) ---
    out3 = jax.block_until_ready(
        mlp_forward(prep2, x2, force_path="tiled", force_bn_kernel="kstream"))
    assert jnp.allclose(out3, ref2, atol=5e-2, rtol=5e-2), "tiled(kstream) mismatch"

    print("KERNEL_OK")
</pallas_src>

<mosaic_0001>
module attributes {stable_mosaic.version = 11 : i64} {
  func.func @kernel(%arg0: memref<8x256xbf16, #tpu.memory_space<vmem>>, %arg1: memref<256x256xbf16, #tpu.memory_space<vmem>>, %arg2: memref<1x256xf32, #tpu.memory_space<vmem>>, %arg3: memref<1x256xf32, #tpu.memory_space<vmem>>, %arg4: memref<1x256xf32, #tpu.memory_space<vmem>>, %arg5: memref<256x256xbf16, #tpu.memory_space<vmem>>, %arg6: memref<1x256xf32, #tpu.memory_space<vmem>>, %arg7: memref<1x256xf32, #tpu.memory_space<vmem>>, %arg8: memref<1x256xf32, #tpu.memory_space<vmem>>, %arg9: memref<256x256xbf16, #tpu.memory_space<vmem>>, %arg10: memref<1x256xf32, #tpu.memory_space<vmem>>, %arg11: memref<8x256xf32, #tpu.memory_space<vmem>>) attributes {dimension_semantics = [], scalar_prefetch = 0 : i64, scratch_operands = 0 : i64, tpu.core_type = #tpu.core_type<tc>} {
    %c0 = arith.constant 0 : index
    %c0_0 = arith.constant 0 : index
    %0 = vector.load %arg0[%c0, %c0_0] : memref<8x256xbf16, #tpu.memory_space<vmem>>, vector<8x256xbf16>
    %c0_1 = arith.constant 0 : index
    %c0_2 = arith.constant 0 : index
    %1 = vector.load %arg1[%c0_1, %c0_2] : memref<256x256xbf16, #tpu.memory_space<vmem>>, vector<256x256xbf16>
    %c0_3 = arith.constant 0 : index
    %c0_4 = arith.constant 0 : index
    %2 = vector.load %arg2[%c0_3, %c0_4] : memref<1x256xf32, #tpu.memory_space<vmem>>, vector<1x256xf32>
    %cst = arith.constant dense<0.000000e+00> : vector<8x256xf32>
    %3 = tpu.matmul %0, %1, %cst {dimension_numbers = #tpu.dot_dimension_numbers<[1], [0], [0], [1], [0, 0, 1, 1], [], []>} : vector<8x256xbf16>, vector<256x256xbf16>, vector<8x256xf32> -> vector<8x256xf32>
    %4 = vector.broadcast %2 : vector<1x256xf32> to vector<8x256xf32>
    %5 = arith.addf %3, %4 : vector<8x256xf32>
    %c0_5 = arith.constant 0 : index
    %c0_6 = arith.constant 0 : index
    %6 = vector.load %arg3[%c0_5, %c0_6] : memref<1x256xf32, #tpu.memory_space<vmem>>, vector<1x256xf32>
    %c0_7 = arith.constant 0 : index
    %c0_8 = arith.constant 0 : index
    %7 = vector.load %arg4[%c0_7, %c0_8] : memref<1x256xf32, #tpu.memory_space<vmem>>, vector<1x256xf32>
    %cst_9 = arith.constant dense<0.000000e+00> : vector<256xf32>
    %8 = vector.multi_reduction <add>, %5, %cst_9 [0] : vector<8x256xf32> to vector<256xf32>
    %9 = vector.shape_cast %8 : vector<256xf32> to vector<1x256xf32>
    %10 = arith.mulf %5, %5 : vector<8x256xf32>
    %cst_10 = arith.constant dense<0.000000e+00> : vector<256xf32>
    %11 = vector.multi_reduction <add>, %10, %cst_10 [0] : vector<8x256xf32> to vector<256xf32>
    %12 = vector.shape_cast %11 : vector<256xf32> to vector<1x256xf32>
    %cst_11 = arith.constant 1.250000e-01 : f32
    %13 = vector.broadcast %cst_11 : f32 to vector<1x256xf32>
    %14 = arith.mulf %9, %13 : vector<1x256xf32>
    %cst_12 = arith.constant 1.250000e-01 : f32
    %15 = vector.broadcast %cst_12 : f32 to vector<1x256xf32>
    %16 = arith.mulf %12, %15 : vector<1x256xf32>
    %17 = arith.mulf %14, %14 : vector<1x256xf32>
    %18 = arith.subf %16, %17 : vector<1x256xf32>
    %cst_13 = arith.constant 0.000000e+00 : f32
    %19 = vector.broadcast %cst_13 : f32 to vector<1x256xf32>
    %20 = arith.maximumf %18, %19 : vector<1x256xf32>
    %cst_14 = arith.constant 9.99999974E-6 : f32
    %21 = vector.broadcast %cst_14 : f32 to vector<1x256xf32>
    %22 = arith.addf %20, %21 : vector<1x256xf32>
    %23 = math.rsqrt %22 : vector<1x256xf32>
    %24 = arith.mulf %6, %23 : vector<1x256xf32>
    %25 = arith.mulf %14, %24 : vector<1x256xf32>
    %26 = arith.subf %7, %25 : vector<1x256xf32>
    %27 = vector.broadcast %24 : vector<1x256xf32> to vector<8x256xf32>
    %28 = arith.mulf %5, %27 : vector<8x256xf32>
    %29 = vector.broadcast %26 : vector<1x256xf32> to vector<8x256xf32>
    %30 = arith.addf %28, %29 : vector<8x256xf32>
    %cst_15 = arith.constant 0.000000e+00 : f32
    %31 = vector.broadcast %cst_15 : f32 to vector<8x256xf32>
    %32 = arith.maximumf %30, %31 : vector<8x256xf32>
    %33 = arith.truncf %32 : vector<8x256xf32> to vector<8x256xbf16>
    %c0_16 = arith.constant 0 : index
    %c0_17 = arith.constant 0 : index
    %34 = vector.load %arg5[%c0_16, %c0_17] : memref<256x256xbf16, #tpu.memory_space<vmem>>, vector<256x256xbf16>
    %c0_18 = arith.constant 0 : index
    %c0_19 = arith.constant 0 : index
    %35 = vector.load %arg6[%c0_18, %c0_19] : memref<1x256xf32, #tpu.memory_space<vmem>>, vector<1x256xf32>
    %cst_20 = arith.constant dense<0.000000e+00> : vector<8x256xf32>
    %36 = tpu.matmul %33, %34, %cst_20 {dimension_numbers = #tpu.dot_dimension_numbers<[1], [0], [0], [1], [0, 0, 1, 1], [], []>} : vector<8x256xbf16>, vector<256x256xbf16>, vector<8x256xf32> -> vector<8x256xf32>
    %37 = vector.broadcast %35 : vector<1x256xf32> to vector<8x256xf32>
    %38 = arith.addf %36, %37 : vector<8x256xf32>
    %c0_21 = arith.constant 0 : index
    %c0_22 = arith.constant 0 : index
    %39 = vector.load %arg7[%c0_21, %c0_22] : memref<1x256xf32, #tpu.memory_space<vmem>>, vector<1x256xf32>
    %c0_23 = arith.constant 0 : index
    %c0_24 = arith.constant 0 : index
    %40 = vector.load %arg8[%c0_23, %c0_24] : memref<1x256xf32, #tpu.memory_space<vmem>>, vector<1x256xf32>
    %cst_25 = arith.constant dense<0.000000e+00> : vector<256xf32>
    %41 = vector.multi_reduction <add>, %38, %cst_25 [0] : vector<8x256xf32> to vector<256xf32>
    %42 = vector.shape_cast %41 : vector<256xf32> to vector<1x256xf32>
    %43 = arith.mulf %38, %38 : vector<8x256xf32>
    %cst_26 = arith.constant dense<0.000000e+00> : vector<256xf32>
    %44 = vector.multi_reduction <add>, %43, %cst_26 [0] : vector<8x256xf32> to vector<256xf32>
    %45 = vector.shape_cast %44 : vector<256xf32> to vector<1x256xf32>
    %cst_27 = arith.constant 1.250000e-01 : f32
    %46 = vector.broadcast %cst_27 : f32 to vector<1x256xf32>
    %47 = arith.mulf %42, %46 : vector<1x256xf32>
    %cst_28 = arith.constant 1.250000e-01 : f32
    %48 = vector.broadcast %cst_28 : f32 to vector<1x256xf32>
    %49 = arith.mulf %45, %48 : vector<1x256xf32>
    %50 = arith.mulf %47, %47 : vector<1x256xf32>
    %51 = arith.subf %49, %50 : vector<1x256xf32>
    %cst_29 = arith.constant 0.000000e+00 : f32
    %52 = vector.broadcast %cst_29 : f32 to vector<1x256xf32>
    %53 = arith.maximumf %51, %52 : vector<1x256xf32>
    %cst_30 = arith.constant 9.99999974E-6 : f32
    %54 = vector.broadcast %cst_30 : f32 to vector<1x256xf32>
    %55 = arith.addf %53, %54 : vector<1x256xf32>
    %56 = math.rsqrt %55 : vector<1x256xf32>
    %57 = arith.mulf %39, %56 : vector<1x256xf32>
    %58 = arith.mulf %47, %57 : vector<1x256xf32>
    %59 = arith.subf %40, %58 : vector<1x256xf32>
    %60 = vector.broadcast %57 : vector<1x256xf32> to vector<8x256xf32>
    %61 = arith.mulf %38, %60 : vector<8x256xf32>
    %62 = vector.broadcast %59 : vector<1x256xf32> to vector<8x256xf32>
    %63 = arith.addf %61, %62 : vector<8x256xf32>
    %cst_31 = arith.constant 0.000000e+00 : f32
    %64 = vector.broadcast %cst_31 : f32 to vector<8x256xf32>
    %65 = arith.maximumf %63, %64 : vector<8x256xf32>
    %66 = arith.truncf %65 : vector<8x256xf32> to vector<8x256xbf16>
    %c0_32 = arith.constant 0 : index
    %c0_33 = arith.constant 0 : index
    %67 = vector.load %arg9[%c0_32, %c0_33] : memref<256x256xbf16, #tpu.memory_space<vmem>>, vector<256x256xbf16>
    %c0_34 = arith.constant 0 : index
    %c0_35 = arith.constant 0 : index
    %68 = vector.load %arg10[%c0_34, %c0_35] : memref<1x256xf32, #tpu.memory_space<vmem>>, vector<1x256xf32>
    %cst_36 = arith.constant dense<0.000000e+00> : vector<8x256xf32>
    %69 = tpu.matmul %66, %67, %cst_36 {dimension_numbers = #tpu.dot_dimension_numbers<[1], [0], [0], [1], [0, 0, 1, 1], [], []>} : vector<8x256xbf16>, vector<256x256xbf16>, vector<8x256xf32> -> vector<8x256xf32>
    %70 = vector.broadcast %68 : vector<1x256xf32> to vector<8x256xf32>
    %71 = arith.addf %69, %70 : vector<8x256xf32>
    %c0_37 = arith.constant 0 : index
    %c0_38 = arith.constant 0 : index
    %72 = vector.load %arg11[%c0_37, %c0_38] : memref<8x256xf32, #tpu.memory_space<vmem>>, vector<8x256xf32>
    tpu.vector_store %arg11[%c0_37, %c0_38], %71 {strides = array<i32>} : memref<8x256xf32, #tpu.memory_space<vmem>>, vector<8x256xf32>,
    return
  }
}

</mosaic_0001>

<llo_original>
// kernel: tpu_custom_call.1
$region0: #{tpu_custom_call.1}
  #allocation0 [shape = 'u32[]', space=smem, size = 0x4, offset = 0x4, fixed_abs, tag = 'smem constant byte address 0x4 - core index']
  #allocation1 [shape = 'u32[72,128]{1,0:T(1,128)}', space=vmem, size = 0x9000, scoped, tag = 'internal scratch']
  %s0 = inlined_call_operand.hbm [shape: bf16[8,256], index: 0, kind: input, shape index: {}]
  %s1 = inlined_call_operand.hbm [shape: bf16[256,256], index: 1, kind: input, shape index: {}]
  %s2 = inlined_call_operand.hbm [shape: f32[1,256], index: 2, kind: input, shape index: {}]
  %s3 = inlined_call_operand.vmem [shape: f32[1,256], index: 3, kind: input, shape index: {}]
  %s4 = inlined_call_operand.hbm [shape: f32[1,256], index: 4, kind: input, shape index: {}]
  %s5 = inlined_call_operand.hbm [shape: bf16[256,256], index: 5, kind: input, shape index: {}]
  %s6 = inlined_call_operand.vmem [shape: f32[1,256], index: 6, kind: input, shape index: {}]
  %s7 = inlined_call_operand.vmem [shape: f32[1,256], index: 7, kind: input, shape index: {}]
  %s8 = inlined_call_operand.hbm [shape: f32[1,256], index: 8, kind: input, shape index: {}]
  %s9 = inlined_call_operand.hbm [shape: bf16[256,256], index: 9, kind: input, shape index: {}]
  %s10 = inlined_call_operand.vmem [shape: f32[1,256], index: 10, kind: input, shape index: {}]
  %s11 = inlined_call_operand.hbm [shape: f32[8,256], index: 11, kind: output, shape index: {}]
  %s12 = sld [smem:[#allocation0]]
  $region82: #{tpu_custom_call.1} parent=0
    _
  %s14 = ssub.s32 1, %s12
  %s15 = scalar_select 0, %s14, %s12
  $region1: #{tpu_custom_call.1} parent=0
    #allocation2 [shape = 'u8[4096]{0}', space=vmem, size = 0x1000, scoped, tag = 'input window, operand 0, single buffered']
    #allocation3 [shape = 's32[1]{0}', space=sflag, size = 0x4, scoped, tag = 'scoped memory for tpu_custom_call.1']
    #allocation4 [shape = 's32[1]{0}', space=sflag, size = 0x4, scoped, tag = 'scoped memory for tpu_custom_call.1']
    #allocation5 [shape = 'u8[131072]{0}', space=vmem, size = 0x20000, scoped, tag = 'input window, operand 1, single buffered']
    #allocation6 [shape = 's32[1]{0}', space=sflag, size = 0x4, scoped, tag = 'scoped memory for tpu_custom_call.1']
    #allocation7 [shape = 'u8[1024]{0}', space=vmem, size = 0x400, scoped, tag = 'input window, operand 2, single buffered']
    #allocation8 [shape = 'u8[1024]{0}', space=vmem, size = 0x400, scoped, tag = 'input window, operand 4, single buffered']
    #allocation9 [shape = 's32[1]{0}', space=sflag, size = 0x4, scoped, tag = 'scoped memory for tpu_custom_call.1']
    #allocation10 [shape = 'u8[131072]{0}', space=vmem, size = 0x20000, scoped, tag = 'input window, operand 5, single buffered']
    #allocation11 [shape = 'u8[1024]{0}', space=vmem, size = 0x400, scoped, tag = 'input window, operand 8, single buffered']
    #allocation12 [shape = 's32[1]{0}', space=sflag, size = 0x4, scoped, tag = 'scoped memory for tpu_custom_call.1']
    #allocation13 [shape = 'u8[131072]{0}', space=vmem, size = 0x20000, scoped, tag = 'input window, operand 9, single buffered']
    #allocation14 [shape = 'u8[8192]{0}', space=vmem, size = 0x2000, scoped, tag = 'output window, operand 0, single buffered']
    %16 = vsyncpa [#allocation3], 0
    %17 = vsyncpa [#allocation6], 0
    %18 = vsyncpa [#allocation9], 0
    %19 = vsyncpa [#allocation12], 0
    %20 = vsyncpa [#allocation4], 0
    // Predicated region
    $region2: #{tpu_custom_call.1} parent=1 // pred_check
      _
    $region3: #{tpu_custom_call.1} parent=1 // pred_check_branch
      %22 = sbr.rel (0) target = $region5
    $region4: #{tpu_custom_call.1} parent=1 // pred_region
      %24 = vsyncadd [#allocation3], 0
      %s26 = sshll.u32 %s0, 4
      %s27 = int_to_ptr.hbm [resolvable:$true] %s26
      %s28 = sshll.u32 [#allocation2], 4
      %s29 = int_to_ptr.vmem [resolvable:$true] %s28
      %31 = dma.hbm_to_vmem [thread:$0]  %s27, 128, %s29, [#allocation3]
    $region5: #{tpu_custom_call.1} parent=1 // pred_fallthru
      _
    // Predicated region
    $region6: #{tpu_custom_call.1} parent=1 // pred_check
      _
    $region7: #{tpu_custom_call.1} parent=1 // pred_check_branch
      %33 = sbr.rel (0) target = $region9
    $region8: #{tpu_custom_call.1} parent=1 // pred_region
      %35 = vsyncadd [#allocation6], 0
      %s36 = sshll.u32 %s1, 4
      %s37 = int_to_ptr.hbm [resolvable:$true] %s36
      %s38 = sshll.u32 [#allocation5], 4
      %s39 = int_to_ptr.vmem [resolvable:$true] %s38
      %44 = dma.hbm_to_vmem [thread:$0]  %s37, 4096, %s39, [#allocation6], 128, 128, 8
    $region9: #{tpu_custom_call.1} parent=1 // pred_fallthru
      _
    // Predicated region
    $region10: #{tpu_custom_call.1} parent=1 // pred_check
      _
    $region11: #{tpu_custom_call.1} parent=1 // pred_check_branch
      %46 = sbr.rel (0) target = $region13
    $region12: #{tpu_custom_call.1} parent=1 // pred_region
      %48 = vsyncadd [#allocation6], 0
      %s50 = sshll.u32 %s2, 4
      %s51 = int_to_ptr.hbm [resolvable:$true] %s50
      %s52 = sshll.u32 [#allocation7], 4
      %s53 = int_to_ptr.vmem [resolvable:$true] %s52
      %55 = dma.hbm_to_vmem [thread:$0]  %s51, 32, %s53, [#allocation6]
    $region13: #{tpu_custom_call.1} parent=1 // pred_fallthru
      _
    // Predicated region
    $region14: #{tpu_custom_call.1} parent=1 // pred_check
      _
    $region15: #{tpu_custom_call.1} parent=1 // pred_check_branch
      %57 = sbr.rel (0) target = $region17
    $region16: #{tpu_custom_call.1} parent=1 // pred_region
      _
    $region17: #{tpu_custom_call.1} parent=1 // pred_fallthru
      _
    // Predicated region
    $region18: #{tpu_custom_call.1} parent=1 // pred_check
      _
    $region19: #{tpu_custom_call.1} parent=1 // pred_check_branch
      %59 = sbr.rel (0) target = $region21
    $region20: #{tpu_custom_call.1} parent=1 // pred_region
      %61 = vsyncadd [#allocation9], 0
      %s63 = sshll.u32 %s4, 4
      %s64 = int_to_ptr.hbm [resolvable:$true] %s63
      %s65 = sshll.u32 [#allocation8], 4
      %s66 = int_to_ptr.vmem [resolvable:$true] %s65
      %68 = dma.hbm_to_vmem [thread:$0]  %s64, 32, %s66, [#allocation9]
    $region21: #{tpu_custom_call.1} parent=1 // pred_fallthru
      _
    // Predicated region
    $region22: #{tpu_custom_call.1} parent=1 // pred_check
      _
    $region23: #{tpu_custom_call.1} parent=1 // pred_check_branch
      %70 = sbr.rel (0) target = $region25
    $region24: #{tpu_custom_call.1} parent=1 // pred_region
      %72 = vsyncadd [#allocation9], 0
      %s73 = sshll.u32 %s5, 4
      %s74 = int_to_ptr.hbm [resolvable:$true] %s73
      %s75 = sshll.u32 [#allocation10], 4
      %s76 = int_to_ptr.vmem [resolvable:$true] %s75
      %81 = dma.hbm_to_vmem [thread:$0]  %s74, 4096, %s76, [#allocation9], 128, 128, 8
    $region25: #{tpu_custom_call.1} parent=1 // pred_fallthru
      _
    // Predicated region
    $region26: #{tpu_custom_call.1} parent=1 // pred_check
      _
    $region27: #{tpu_custom_call.1} parent=1 // pred_check_branch
      %83 = sbr.rel (0) target = $region29
    $region28: #{tpu_custom_call.1} parent=1 // pred_region
      _
    $region29: #{tpu_custom_call.1} parent=1 // pred_fallthru
      _
    // Predicated region
    $region30: #{tpu_custom_call.1} parent=1 // pred_check
      _
    $region31: #{tpu_custom_call.1} parent=1 // pred_check_branch
      %85 = sbr.rel (0) target = $region33
    $region32: #{tpu_custom_call.1} parent=1 // pred_region
      _
    $region33: #{tpu_custom_call.1} parent=1 // pred_fallthru
      _
    // Predicated region
    $region34: #{tpu_custom_call.1} parent=1 // pred_check
      _
    $region35: #{tpu_custom_call.1} parent=1 // pred_check_branch
      %87 = sbr.rel (0) target = $region37
    $region36: #{tpu_custom_call.1} parent=1 // pred_region
      %89 = vsyncadd [#allocation12], 0
      %s91 = sshll.u32 %s8, 4
      %s92 = int_to_ptr.hbm [resolvable:$true] %s91
      %s93 = sshll.u32 [#allocation11], 4
      %s94 = int_to_ptr.vmem [resolvable:$true] %s93
      %96 = dma.hbm_to_vmem [thread:$0]  %s92, 32, %s94, [#allocation12]
    $region37: #{tpu_custom_call.1} parent=1 // pred_fallthru
      _
    // Predicated region
    $region38: #{tpu_custom_call.1} parent=1 // pred_check
      _
    $region39: #{tpu_custom_call.1} parent=1 // pred_check_branch
      %98 = sbr.rel (0) target = $region41
    $region40: #{tpu_custom_call.1} parent=1 // pred_region
      %100 = vsyncadd [#allocation12], 0
      %s101 = sshll.u32 %s9, 4
      %s102 = int_to_ptr.hbm [resolvable:$true] %s101
      %s103 = sshll.u32 [#allocation13], 4
      %s104 = int_to_ptr.vmem [resolvable:$true] %s103
      %109 = dma.hbm_to_vmem [thread:$0]  %s102, 4096, %s104, [#allocation12], 128, 128, 8
    $region41: #{tpu_custom_call.1} parent=1 // pred_fallthru
      _
    // Predicated region
    $region42: #{tpu_custom_call.1} parent=1 // pred_check
      _
    $region43: #{tpu_custom_call.1} parent=1 // pred_check_branch
      %111 = sbr.rel (0) target = $region45
    $region44: #{tpu_custom_call.1} parent=1 // pred_region
      _
    $region45: #{tpu_custom_call.1} parent=1 // pred_fallthru
      _
    // Predicated region
    $region46: #{tpu_custom_call.1} parent=1 // pred_check
      _
    $region47: #{tpu_custom_call.1} parent=1 // pred_check_branch
      %113 = sbr.rel (0) target = $region49
    $region48: #{tpu_custom_call.1} parent=1 // pred_region
      %115 = dma.done [#allocation3], 128
    $region49: #{tpu_custom_call.1} parent=1 // pred_fallthru
      _
    // Predicated region
    $region50: #{tpu_custom_call.1} parent=1 // pred_check
      _
    $region51: #{tpu_custom_call.1} parent=1 // pred_check_branch
      %117 = sbr.rel (0) target = $region53
    $region52: #{tpu_custom_call.1} parent=1 // pred_region
      %119 = dma.done [#allocation6], 4096
    $region53: #{tpu_custom_call.1} parent=1 // pred_fallthru
      _
    // Predicated region
    $region54: #{tpu_custom_call.1} parent=1 // pred_check
      _
    $region55: #{tpu_custom_call.1} parent=1 // pred_check_branch
      %121 = sbr.rel (0) target = $region57
    $region56: #{tpu_custom_call.1} parent=1 // pred_region
      %123 = dma.done [#allocation6], 32
    $region57: #{tpu_custom_call.1} parent=1 // pred_fallthru
      _
    // Predicated region
    $region58: #{tpu_custom_call.1} parent=1 // pred_check
      _
    $region59: #{tpu_custom_call.1} parent=1 // pred_check_branch
      %125 = sbr.rel (0) target = $region61
    $region60: #{tpu_custom_call.1} parent=1 // pred_region
      %127 = dma.done [#allocation9], 32
    $region61: #{tpu_custom_call.1} parent=1 // pred_fallthru
      _
    // Predicated region
    $region62: #{tpu_custom_call.1} parent=1 // pred_check
      _
    $region63: #{tpu_custom_call.1} parent=1 // pred_check_branch
      %129 = sbr.rel (0) target = $region65
    $region64: #{tpu_custom_call.1} parent=1 // pred_region
      %131 = dma.done [#allocation9], 4096
    $region65: #{tpu_custom_call.1} parent=1 // pred_fallthru
      _
    // Predicated region
    $region66: #{tpu_custom_call.1} parent=1 // pred_check
      _
    $region67: #{tpu_custom_call.1} parent=1 // pred_check_branch
      %133 = sbr.rel (0) target = $region69
    $region68: #{tpu_custom_call.1} parent=1 // pred_region
      %135 = dma.done [#allocation12], 32
    $region69: #{tpu_custom_call.1} parent=1 // pred_fallthru
      _
    // Predicated region
    $region70: #{tpu_custom_call.1} parent=1 // pred_check
      _
    $region71: #{tpu_custom_call.1} parent=1 // pred_check_branch
      %137 = sbr.rel (0) target = $region73
    $region72: #{tpu_custom_call.1} parent=1 // pred_region
      %139 = dma.done [#allocation12], 4096
    $region73: #{tpu_custom_call.1} parent=1 // pred_fallthru
      _
    %v140 = vld [vmem:[#allocation2] sm:$0xff]
    %v141 = vld [vmem:[#allocation5] sm:$0xff]
    %v142 = vld [vmem:[#allocation5 + $0x8] sm:$0xff]
    %v143 = vld [vmem:[#allocation5 + $0x10] sm:$0xff]
    %v144 = vld [vmem:[#allocation5 + $0x18] sm:$0xff]
    %v145 = vld [vmem:[#allocation5 + $0x20] sm:$0xff]
    %v146 = vld [vmem:[#allocation5 + $0x28] sm:$0xff]
    %v147 = vld [vmem:[#allocation5 + $0x30] sm:$0xff]
    %v148 = vld [vmem:[#allocation5 + $0x38] sm:$0xff]
    %v149 = vld [vmem:[#allocation5 + $0x40] sm:$0xff]
    %v150 = vld [vmem:[#allocation5 + $0x48] sm:$0xff]
    %v151 = vld [vmem:[#allocation5 + $0x50] sm:$0xff]
    %v152 = vld [vmem:[#allocation5 + $0x58] sm:$0xff]
    %v153 = vld [vmem:[#allocation5 + $0x60] sm:$0xff]
    %v154 = vld [vmem:[#allocation5 + $0x68] sm:$0xff]
    %v155 = vld [vmem:[#allocation5 + $0x70] sm:$0xff]
    %v156 = vld [vmem:[#allocation5 + $0x78] sm:$0xff]
    %v157 = vld [vmem:[#allocation5 + $0x80] sm:$0xff]
    %v158 = vld [vmem:[#allocation5 + $0x88] sm:$0xff]
    %v159 = vld [vmem:[#allocation5 + $0x90] sm:$0xff]
    %v160 = vld [vmem:[#allocation5 + $0x98] sm:$0xff]
    %v161 = vld [vmem:[#allocation5 + $0xa0] sm:$0xff]
    %v162 = vld [vmem:[#allocation5 + $0xa8] sm:$0xff]
    %v163 = vld [vmem:[#allocation5 + $0xb0] sm:$0xff]
    %v164 = vld [vmem:[#allocation5 + $0xb8] sm:$0xff]
    %v165 = vld [vmem:[#allocation5 + $0xc0] sm:$0xff]
    %v166 = vld [vmem:[#allocation5 + $0xc8] sm:$0xff]
    %v167 = vld [vmem:[#allocation5 + $0xd0] sm:$0xff]
    %v168 = vld [vmem:[#allocation5 + $0xd8] sm:$0xff]
    %v169 = vld [vmem:[#allocation5 + $0xe0] sm:$0xff]
    %v170 = vld [vmem:[#allocation5 + $0xe8] sm:$0xff]
    %v171 = vld [vmem:[#allocation5 + $0xf0] sm:$0xff]
    %v172 = vld [vmem:[#allocation5 + $0xf8] sm:$0xff]
    %v173 = vld [vmem:[#allocation7] sm:$0x3]
    %v175 = vperm.slane %v173, 0
    %v176 = vperm.slane %v173, 1
    %v180 = vunpack.c.l.b16 %v140
    %v181 = vunpack.c.h.b16 %v140
    %v182 = vpack.c.b16 %v180, %v180
    %v183 = vpack.c.b16 %v181, %v181
    %v218 = vunpack.c.l.b16 %v141
    %v219 = vunpack.c.h.b16 %v141
    %v220 = vunpack.c.l.b16 %v142
    %v221 = vunpack.c.h.b16 %v142
    %v222 = vunpack.c.l.b16 %v143
    %v223 = vunpack.c.h.b16 %v143
    %v224 = vunpack.c.l.b16 %v144
    %v225 = vunpack.c.h.b16 %v144
    %v226 = vunpack.c.l.b16 %v145
    %v227 = vunpack.c.h.b16 %v145
    %v228 = vunpack.c.l.b16 %v146
    %v229 = vunpack.c.h.b16 %v146
    %v230 = vunpack.c.l.b16 %v147
    %v231 = vunpack.c.h.b16 %v147
    %v232 = vunpack.c.l.b16 %v148
    %v233 = vunpack.c.h.b16 %v148
    %v234 = vunpack.c.l.b16 %v149
    %v235 = vunpack.c.h.b16 %v149
    %v236 = vunpack.c.l.b16 %v150
    %v237 = vunpack.c.h.b16 %v150
    %v238 = vunpack.c.l.b16 %v151
    %v239 = vunpack.c.h.b16 %v151
    %v240 = vunpack.c.l.b16 %v152
    %v241 = vunpack.c.h.b16 %v152
    %v242 = vunpack.c.l.b16 %v153
    %v243 = vunpack.c.h.b16 %v153
    %v244 = vunpack.c.l.b16 %v154
    %v245 = vunpack.c.h.b16 %v154
    %v246 = vunpack.c.l.b16 %v155
    %v247 = vunpack.c.h.b16 %v155
    %v248 = vunpack.c.l.b16 %v156
    %v249 = vunpack.c.h.b16 %v156
    %v250 = vunpack.c.l.b16 %v157
    %v251 = vunpack.c.h.b16 %v157
    %v252 = vunpack.c.l.b16 %v158
    %v253 = vunpack.c.h.b16 %v158
    %v254 = vunpack.c.l.b16 %v159
    %v255 = vunpack.c.h.b16 %v159
    %v256 = vunpack.c.l.b16 %v160
    %v257 = vunpack.c.h.b16 %v160
    %v258 = vunpack.c.l.b16 %v161
    %v259 = vunpack.c.h.b16 %v161
    %v260 = vunpack.c.l.b16 %v162
    %v261 = vunpack.c.h.b16 %v162
    %v262 = vunpack.c.l.b16 %v163
    %v263 = vunpack.c.h.b16 %v163
    %v264 = vunpack.c.l.b16 %v164
    %v265 = vunpack.c.h.b16 %v164
    %v266 = vunpack.c.l.b16 %v165
    %v267 = vunpack.c.h.b16 %v165
    %v268 = vunpack.c.l.b16 %v166
    %v269 = vunpack.c.h.b16 %v166
    %v270 = vunpack.c.l.b16 %v167
    %v271 = vunpack.c.h.b16 %v167
    %v272 = vunpack.c.l.b16 %v168
    %v273 = vunpack.c.h.b16 %v168
    %v274 = vunpack.c.l.b16 %v169
    %v275 = vunpack.c.h.b16 %v169
    %v276 = vunpack.c.l.b16 %v170
    %v277 = vunpack.c.h.b16 %v170
    %v278 = vunpack.c.l.b16 %v171
    %v279 = vunpack.c.h.b16 %v171
    %v280 = vunpack.c.l.b16 %v172
    %v281 = vunpack.c.h.b16 %v172
    %v282 = vpack.c.b16 %v220, %v218
    %v283 = vpack.c.b16 %v221, %v219
    %v284 = vpack.c.b16 %v224, %v222
    %v285 = vpack.c.b16 %v225, %v223
    %v286 = vpack.c.b16 %v228, %v226
    %v287 = vpack.c.b16 %v229, %v227
    %v288 = vpack.c.b16 %v232, %v230
    %v289 = vpack.c.b16 %v233, %v231
    %v290 = vpack.c.b16 %v236, %v234
    %v291 = vpack.c.b16 %v237, %v235
    %v292 = vpack.c.b16 %v240, %v238
    %v293 = vpack.c.b16 %v241, %v239
    %v294 = vpack.c.b16 %v244, %v242
    %v295 = vpack.c.b16 %v245, %v243
    %v296 = vpack.c.b16 %v248, %v246
    %v297 = vpack.c.b16 %v249, %v247
    %v298 = vpack.c.b16 %v252, %v250
    %v299 = vpack.c.b16 %v253, %v251
    %v300 = vpack.c.b16 %v256, %v254
    %v301 = vpack.c.b16 %v257, %v255
    %v302 = vpack.c.b16 %v260, %v258
    %v303 = vpack.c.b16 %v261, %v259
    %v304 = vpack.c.b16 %v264, %v262
    %v305 = vpack.c.b16 %v265, %v263
    %v306 = vpack.c.b16 %v268, %v266
    %v307 = vpack.c.b16 %v269, %v267
    %v308 = vpack.c.b16 %v272, %v270
    %v309 = vpack.c.b16 %v273, %v271
    %v310 = vpack.c.b16 %v276, %v274
    %v311 = vpack.c.b16 %v277, %v275
    %v312 = vpack.c.b16 %v280, %v278
    %v313 = vpack.c.b16 %v281, %v279
    %346 = vmatpush.bf16.msra.mxu0 %v296
    %347 = vmatpush.bf16.msra.mxu0 %v294
    %348 = vmatpush.bf16.msra.mxu0 %v292
    %349 = vmatpush.bf16.msra.mxu0 %v290
    %350 = vmatpush.bf16.msra.mxu0 %v288
    %351 = vmatpush.bf16.msra.mxu0 %v286
    %352 = vmatpush.bf16.msra.mxu0 %v284
    %353 = vmatpush.bf16.msra.mxu0 %v282
    %354 = vmatmul.bf16.gmra.mxu0 %v182
    %v355 = vpop.f32.mrf.mxu0
    %v356 = vadd.f32 %v175, %v355
    %v357 = vpop.f32.mrf.mxu0
    %358 = vdwg.mxu0
    %359 = vmatpush.bf16.msra.mxu0 %v312
    %360 = vmatpush.bf16.msra.mxu0 %v310
    %361 = vmatpush.bf16.msra.mxu0 %v308
    %362 = vmatpush.bf16.msra.mxu0 %v306
    %363 = vmatpush.bf16.msra.mxu0 %v304
    %364 = vmatpush.bf16.msra.mxu0 %v302
    %365 = vmatpush.bf16.msra.mxu0 %v300
    %366 = vmatpush.bf16.msra.mxu0 %v298
    %367 = vmatmul.bf16.gmra.mxu0 %v183
    %v368 = vpop.f32.mrf.mxu0
    %v369 = vadd.f32 %v356, %v368
    %v370 = vpop.f32.mrf.mxu0
    %371 = vdwg.mxu0
    %372 = vmatpush.bf16.msra.mxu0 %v297
    %373 = vmatpush.bf16.msra.mxu0 %v295
    %374 = vmatpush.bf16.msra.mxu0 %v293
    %375 = vmatpush.bf16.msra.mxu0 %v291
    %376 = vmatpush.bf16.msra.mxu0 %v289
    %377 = vmatpush.bf16.msra.mxu0 %v287
    %378 = vmatpush.bf16.msra.mxu0 %v285
    %379 = vmatpush.bf16.msra.mxu0 %v283
    %380 = vmatmul.bf16.gmra.mxu0 %v182
    %v381 = vpop.f32.mrf.mxu0
    %v382 = vadd.f32 %v176, %v381
    %v383 = vpop.f32.mrf.mxu0
    %384 = vdwg.mxu0
    %385 = vmatpush.bf16.msra.mxu0 %v313
    %386 = vmatpush.bf16.msra.mxu0 %v311
    %387 = vmatpush.bf16.msra.mxu0 %v309
    %388 = vmatpush.bf16.msra.mxu0 %v307
    %389 = vmatpush.bf16.msra.mxu0 %v305
    %390 = vmatpush.bf16.msra.mxu0 %v303
    %391 = vmatpush.bf16.msra.mxu0 %v301
    %392 = vmatpush.bf16.msra.mxu0 %v299
    %393 = vmatmul.bf16.gmra.mxu0 %v183
    %v394 = vpop.f32.mrf.mxu0
    %v395 = vadd.f32 %v382, %v394
    %v396 = vpop.f32.mrf.mxu0
    %397 = vdwg.mxu0
    %v398 = vld [vmem:[%s3] sm:$0x3]
    %v399 = vld [vmem:[#allocation8] sm:$0x3]
    %v400 = vrot.slane %v369, 4
    %v401 = vadd.f32 %v369, %v400
    %v402 = vrot.slane %v401, 2
    %v403 = vadd.f32 %v401, %v402
    %v404 = vrot.slane %v403, 1
    %v405 = vadd.f32 %v403, %v404
    %v406 = vrot.slane %v395, 4
    %v407 = vadd.f32 %v395, %v406
    %v408 = vrot.slane %v407, 2
    %v409 = vadd.f32 %v407, %v408
    %v410 = vrot.slane %v409, 1
    %v411 = vadd.f32 %v409, %v410
    %v412 = vmul.f32 %v369, %v369
    %v413 = vmul.f32 %v395, %v395
    %v414 = vrot.slane %v412, 4
    %v415 = vadd.f32 %v412, %v414
    %v416 = vrot.slane %v415, 2
    %v417 = vadd.f32 %v415, %v416
    %v418 = vrot.slane %v417, 1
    %v419 = vadd.f32 %v417, %v418
    %v420 = vrot.slane %v413, 4
    %v421 = vadd.f32 %v413, %v420
    %v422 = vrot.slane %v421, 2
    %v423 = vadd.f32 %v421, %v422
    %v424 = vrot.slane %v423, 1
    %v425 = vadd.f32 %v423, %v424
    %v426 = vmul.f32 %v405, 0.125
    %v427 = vmul.f32 %v411, 0.125
    %v428 = vmul.f32 %v419, 0.125
    %v429 = vmul.f32 %v425, 0.125
    %v430 = vmul.f32 %v426, %v426
    %v431 = vmul.f32 %v427, %v427
    %v432 = vsub.f32 %v428, %v430
    %v433 = vsub.f32 %v429, %v431
    %v434 = vmax.f32 %v432, 0.0
    %v435 = vmax.f32 %v433, 0.0
    %v436 = vadd.f32 %v434, 1e-05
    %v437 = vadd.f32 %v435, 1e-05
    %v438 = vrsqrt.pop %v436
    %v439 = vmul.f32 %v438, %v436
    %v440 = vmul.f32 %v439, %v438
    %v441 = vmul.f32 0.5, %v440
    %v442 = vsub.f32 1.5, %v441
    %v443 = vmul.f32 %v438, %v442
    %vm444 = vweird.f32 %v436
    %vm445 = vweird.f32 %v438
    %vm446 = vmor %vm444, %vm445
    %v447 = vsel %vm446, %v438, %v443
    %v448 = vrsqrt.pop %v437
    %v449 = vmul.f32 %v448, %v437
    %v450 = vmul.f32 %v449, %v448
    %v451 = vmul.f32 0.5, %v450
    %v452 = vsub.f32 1.5, %v451
    %v453 = vmul.f32 %v448, %v452
    %vm454 = vweird.f32 %v437
    %vm455 = vweird.f32 %v448
    %vm456 = vmor %vm454, %vm455
    %v457 = vsel %vm456, %v448, %v453
    %v460 = vrot.slane %v457, 7
    %vm461 = vcmask 1040384
    %v462 = vsel %vm461, %v447, %v460
    %v464 = vmul.f32 %v398, %v462
    %v466 = vperm.slane %v464, 0
    %v467 = vperm.slane %v464, 1
    %v470 = vmul.f32 %v426, %v466
    %v471 = vmul.f32 %v427, %v467
    %v474 = vrot.slane %v471, 7
    %v475 = vsel %vm461, %v470, %v474
    %v477 = vsub.f32 %v399, %v475
    %v478 = vmul.f32 %v369, %v466
    %v479 = vmul.f32 %v395, %v467
    %v481 = vperm.slane %v477, 0
    %v482 = vperm.slane %v477, 1
    %v485 = vadd.f32 %v478, %v481
    %v486 = vadd.f32 %v479, %v482
    %v487 = vmax.f32 %v485, 0.0
    %v488 = vmax.f32 %v486, 0.0
    %v489 = vpack.c.bf16 %v487, %v487
    %v490 = vpack.c.bf16 %v488, %v488
    %v491 = vld [vmem:[#allocation10] sm:$0xff]
    %v492 = vld [vmem:[#allocation10 + $0x8] sm:$0xff]
    %v493 = vld [vmem:[#allocation10 + $0x10] sm:$0xff]
    %v494 = vld [vmem:[#allocation10 + $0x18] sm:$0xff]
    %v495 = vld [vmem:[#allocation10 + $0x20] sm:$0xff]
    %v496 = vld [vmem:[#allocation10 + $0x28] sm:$0xff]
    %v497 = vld [vmem:[#allocation10 + $0x30] sm:$0xff]
    %v498 = vld [vmem:[#allocation10 + $0x38] sm:$0xff]
    %v499 = vld [vmem:[#allocation10 + $0x40] sm:$0xff]
    %v500 = vld [vmem:[#allocation10 + $0x48] sm:$0xff]
    %v501 = vld [vmem:[#allocation10 + $0x50] sm:$0xff]
    %v502 = vld [vmem:[#allocation10 + $0x58] sm:$0xff]
    %v503 = vld [vmem:[#allocation10 + $0x60] sm:$0xff]
    %v504 = vld [vmem:[#allocation10 + $0x68] sm:$0xff]
    %v505 = vld [vmem:[#allocation10 + $0x70] sm:$0xff]
    %v506 = vld [vmem:[#allocation10 + $0x78] sm:$0xff]
    %v507 = vld [vmem:[#allocation10 + $0x80] sm:$0xff]
    %v508 = vld [vmem:[#allocation10 + $0x88] sm:$0xff]
    %v509 = vld [vmem:[#allocation10 + $0x90] sm:$0xff]
    %v510 = vld [vmem:[#allocation10 + $0x98] sm:$0xff]
    %v511 = vld [vmem:[#allocation10 + $0xa0] sm:$0xff]
    %v512 = vld [vmem:[#allocation10 + $0xa8] sm:$0xff]
    %v513 = vld [vmem:[#allocation10 + $0xb0] sm:$0xff]
    %v514 = vld [vmem:[#allocation10 + $0xb8] sm:$0xff]
    %v515 = vld [vmem:[#allocation10 + $0xc0] sm:$0xff]
    %v516 = vld [vmem:[#allocation10 + $0xc8] sm:$0xff]
    %v517 = vld [vmem:[#allocation10 + $0xd0] sm:$0xff]
    %v518 = vld [vmem:[#allocation10 + $0xd8] sm:$0xff]
    %v519 = vld [vmem:[#allocation10 + $0xe0] sm:$0xff]
    %v520 = vld [vmem:[#allocation10 + $0xe8] sm:$0xff]
    %v521 = vld [vmem:[#allocation10 + $0xf0] sm:$0xff]
    %v522 = vld [vmem:[#allocation10 + $0xf8] sm:$0xff]
    %v523 = vld [vmem:[%s6] sm:$0x3]
    %v525 = vperm.slane %v523, 0
    %v526 = vperm.slane %v523, 1
    %v561 = vunpack.c.l.b16 %v491
    %v562 = vunpack.c.h.b16 %v491
    %v563 = vunpack.c.l.b16 %v492
    %v564 = vunpack.c.h.b16 %v492
    %v565 = vunpack.c.l.b16 %v493
    %v566 = vunpack.c.h.b16 %v493
    %v567 = vunpack.c.l.b16 %v494
    %v568 = vunpack.c.h.b16 %v494
    %v569 = vunpack.c.l.b16 %v495
    %v570 = vunpack.c.h.b16 %v495
    %v571 = vunpack.c.l.b16 %v496
    %v572 = vunpack.c.h.b16 %v496
    %v573 = vunpack.c.l.b16 %v497
    %v574 = vunpack.c.h.b16 %v497
    %v575 = vunpack.c.l.b16 %v498
    %v576 = vunpack.c.h.b16 %v498
    %v577 = vunpack.c.l.b16 %v499
    %v578 = vunpack.c.h.b16 %v499
    %v579 = vunpack.c.l.b16 %v500
    %v580 = vunpack.c.h.b16 %v500
    %v581 = vunpack.c.l.b16 %v501
    %v582 = vunpack.c.h.b16 %v501
    %v583 = vunpack.c.l.b16 %v502
    %v584 = vunpack.c.h.b16 %v502
    %v585 = vunpack.c.l.b16 %v503
    %v586 = vunpack.c.h.b16 %v503
    %v587 = vunpack.c.l.b16 %v504
    %v588 = vunpack.c.h.b16 %v504
    %v589 = vunpack.c.l.b16 %v505
    %v590 = vunpack.c.h.b16 %v505
    %v591 = vunpack.c.l.b16 %v506
    %v592 = vunpack.c.h.b16 %v506
    %v593 = vunpack.c.l.b16 %v507
    %v594 = vunpack.c.h.b16 %v507
    %v595 = vunpack.c.l.b16 %v508
    %v596 = vunpack.c.h.b16 %v508
    %v597 = vunpack.c.l.b16 %v509
    %v598 = vunpack.c.h.b16 %v509
    %v599 = vunpack.c.l.b16 %v510
    %v600 = vunpack.c.h.b16 %v510
    %v601 = vunpack.c.l.b16 %v511
    %v602 = vunpack.c.h.b16 %v511
    %v603 = vunpack.c.l.b16 %v512
    %v604 = vunpack.c.h.b16 %v512
    %v605 = vunpack.c.l.b16 %v513
    %v606 = vunpack.c.h.b16 %v513
    %v607 = vunpack.c.l.b16 %v514
    %v608 = vunpack.c.h.b16 %v514
    %v609 = vunpack.c.l.b16 %v515
    %v610 = vunpack.c.h.b16 %v515
    %v611 = vunpack.c.l.b16 %v516
    %v612 = vunpack.c.h.b16 %v516
    %v613 = vunpack.c.l.b16 %v517
    %v614 = vunpack.c.h.b16 %v517
    %v615 = vunpack.c.l.b16 %v518
    %v616 = vunpack.c.h.b16 %v518
    %v617 = vunpack.c.l.b16 %v519
    %v618 = vunpack.c.h.b16 %v519
    %v619 = vunpack.c.l.b16 %v520
    %v620 = vunpack.c.h.b16 %v520
    %v621 = vunpack.c.l.b16 %v521
    %v622 = vunpack.c.h.b16 %v521
    %v623 = vunpack.c.l.b16 %v522
    %v624 = vunpack.c.h.b16 %v522
    %v625 = vpack.c.b16 %v563, %v561
    %v626 = vpack.c.b16 %v564, %v562
    %v627 = vpack.c.b16 %v567, %v565
    %v628 = vpack.c.b16 %v568, %v566
    %v629 = vpack.c.b16 %v571, %v569
    %v630 = vpack.c.b16 %v572, %v570
    %v631 = vpack.c.b16 %v575, %v573
    %v632 = vpack.c.b16 %v576, %v574
    %v633 = vpack.c.b16 %v579, %v577
    %v634 = vpack.c.b16 %v580, %v578
    %v635 = vpack.c.b16 %v583, %v581
    %v636 = vpack.c.b16 %v584, %v582
    %v637 = vpack.c.b16 %v587, %v585
    %v638 = vpack.c.b16 %v588, %v586
    %v639 = vpack.c.b16 %v591, %v589
    %v640 = vpack.c.b16 %v592, %v590
    %v641 = vpack.c.b16 %v595, %v593
    %v642 = vpack.c.b16 %v596, %v594
    %v643 = vpack.c.b16 %v599, %v597
    %v644 = vpack.c.b16 %v600, %v598
    %v645 = vpack.c.b16 %v603, %v601
    %v646 = vpack.c.b16 %v604, %v602
    %v647 = vpack.c.b16 %v607, %v605
    %v648 = vpack.c.b16 %v608, %v606
    %v649 = vpack.c.b16 %v611, %v609
    %v650 = vpack.c.b16 %v612, %v610
    %v651 = vpack.c.b16 %v615, %v613
    %v652 = vpack.c.b16 %v616, %v614
    %v653 = vpack.c.b16 %v619, %v617
    %v654 = vpack.c.b16 %v620, %v618
    %v655 = vpack.c.b16 %v623, %v621
    %v656 = vpack.c.b16 %v624, %v622
    %689 = vmatpush.bf16.msra.mxu0 %v639
    %690 = vmatpush.bf16.msra.mxu0 %v637
    %691 = vmatpush.bf16.msra.mxu0 %v635
    %692 = vmatpush.bf16.msra.mxu0 %v633
    %693 = vmatpush.bf16.msra.mxu0 %v631
    %694 = vmatpush.bf16.msra.mxu0 %v629
    %695 = vmatpush.bf16.msra.mxu0 %v627
    %696 = vmatpush.bf16.msra.mxu0 %v625
    %697 = vmatmul.bf16.gmra.mxu0 %v489
    %v698 = vpop.f32.mrf.mxu0
    %v699 = vadd.f32 %v525, %v698
    %v700 = vpop.f32.mrf.mxu0
    %701 = vdwg.mxu0
    %702 = vmatpush.bf16.msra.mxu0 %v655
    %703 = vmatpush.bf16.msra.mxu0 %v653
    %704 = vmatpush.bf16.msra.mxu0 %v651
    %705 = vmatpush.bf16.msra.mxu0 %v649
    %706 = vmatpush.bf16.msra.mxu0 %v647
    %707 = vmatpush.bf16.msra.mxu0 %v645
    %708 = vmatpush.bf16.msra.mxu0 %v643
    %709 = vmatpush.bf16.msra.mxu0 %v641
    %710 = vmatmul.bf16.gmra.mxu0 %v490
    %v711 = vpop.f32.mrf.mxu0
    %v712 = vadd.f32 %v699, %v711
    %v713 = vpop.f32.mrf.mxu0
    %714 = vdwg.mxu0
    %715 = vmatpush.bf16.msra.mxu0 %v640
    %716 = vmatpush.bf16.msra.mxu0 %v638
    %717 = vmatpush.bf16.msra.mxu0 %v636
    %718 = vmatpush.bf16.msra.mxu0 %v634
    %719 = vmatpush.bf16.msra.mxu0 %v632
    %720 = vmatpush.bf16.msra.mxu0 %v630
    %721 = vmatpush.bf16.msra.mxu0 %v628
    %722 = vmatpush.bf16.msra.mxu0 %v626
    %723 = vmatmul.bf16.gmra.mxu0 %v489
    %v724 = vpop.f32.mrf.mxu0
    %v725 = vadd.f32 %v526, %v724
    %v726 = vpop.f32.mrf.mxu0
    %727 = vdwg.mxu0
    %728 = vmatpush.bf16.msra.mxu0 %v656
    %729 = vmatpush.bf16.msra.mxu0 %v654
    %730 = vmatpush.bf16.msra.mxu0 %v652
    %731 = vmatpush.bf16.msra.mxu0 %v650
    %732 = vmatpush.bf16.msra.mxu0 %v648
    %733 = vmatpush.bf16.msra.mxu0 %v646
    %734 = vmatpush.bf16.msra.mxu0 %v644
    %735 = vmatpush.bf16.msra.mxu0 %v642
    %736 = vmatmul.bf16.gmra.mxu0 %v490
    %v737 = vpop.f32.mrf.mxu0
    %v738 = vadd.f32 %v725, %v737
    %v739 = vpop.f32.mrf.mxu0
    %740 = vdwg.mxu0
    %v741 = vld [vmem:[%s7] sm:$0x3]
    %v742 = vld [vmem:[#allocation11] sm:$0x3]
    %v743 = vrot.slane %v712, 4
    %v744 = vadd.f32 %v712, %v743
    %v745 = vrot.slane %v744, 2
    %v746 = vadd.f32 %v744, %v745
    %v747 = vrot.slane %v746, 1
    %v748 = vadd.f32 %v746, %v747
    %v749 = vrot.slane %v738, 4
    %v750 = vadd.f32 %v738, %v749
    %v751 = vrot.slane %v750, 2
    %v752 = vadd.f32 %v750, %v751
    %v753 = vrot.slane %v752, 1
    %v754 = vadd.f32 %v752, %v753
    %v755 = vmul.f32 %v712, %v712
    %v756 = vmul.f32 %v738, %v738
    %v757 = vrot.slane %v755, 4
    %v758 = vadd.f32 %v755, %v757
    %v759 = vrot.slane %v758, 2
    %v760 = vadd.f32 %v758, %v759
    %v761 = vrot.slane %v760, 1
    %v762 = vadd.f32 %v760, %v761
    %v763 = vrot.slane %v756, 4
    %v764 = vadd.f32 %v756, %v763
    %v765 = vrot.slane %v764, 2
    %v766 = vadd.f32 %v764, %v765
    %v767 = vrot.slane %v766, 1
    %v768 = vadd.f32 %v766, %v767
    %v769 = vmul.f32 %v748, 0.125
    %v770 = vmul.f32 %v754, 0.125
    %v771 = vmul.f32 %v762, 0.125
    %v772 = vmul.f32 %v768, 0.125
    %v773 = vmul.f32 %v769, %v769
    %v774 = vmul.f32 %v770, %v770
    %v775 = vsub.f32 %v771, %v773
    %v776 = vsub.f32 %v772, %v774
    %v777 = vmax.f32 %v775, 0.0
    %v778 = vmax.f32 %v776, 0.0
    %v779 = vadd.f32 %v777, 1e-05
    %v780 = vadd.f32 %v778, 1e-05
    %v781 = vrsqrt.pop %v779
    %v782 = vmul.f32 %v781, %v779
    %v783 = vmul.f32 %v782, %v781
    %v784 = vmul.f32 0.5, %v783
    %v785 = vsub.f32 1.5, %v784
    %v786 = vmul.f32 %v781, %v785
    %vm787 = vweird.f32 %v779
    %vm788 = vweird.f32 %v781
    %vm789 = vmor %vm787, %vm788
    %v790 = vsel %vm789, %v781, %v786
    %v791 = vrsqrt.pop %v780
    %v792 = vmul.f32 %v791, %v780
    %v793 = vmul.f32 %v792, %v791
    %v794 = vmul.f32 0.5, %v793
    %v795 = vsub.f32 1.5, %v794
    %v796 = vmul.f32 %v791, %v795
    %vm797 = vweird.f32 %v780
    %vm798 = vweird.f32 %v791
    %vm799 = vmor %vm797, %vm798
    %v800 = vsel %vm799, %v791, %v796
    %v803 = vrot.slane %v800, 7
    %v804 = vsel %vm461, %v790, %v803
    %v806 = vmul.f32 %v741, %v804
    %v808 = vperm.slane %v806, 0
    %v809 = vperm.slane %v806, 1
    %v812 = vmul.f32 %v769, %v808
    %v813 = vmul.f32 %v770, %v809
    %v816 = vrot.slane %v813, 7
    %v817 = vsel %vm461, %v812, %v816
    %v819 = vsub.f32 %v742, %v817
    %v820 = vmul.f32 %v712, %v808
    %v821 = vmul.f32 %v738, %v809
    %v823 = vperm.slane %v819, 0
    %v824 = vperm.slane %v819, 1
    %v827 = vadd.f32 %v820, %v823
    %v828 = vadd.f32 %v821, %v824
    %v829 = vmax.f32 %v827, 0.0
    %v830 = vmax.f32 %v828, 0.0
    %v831 = vpack.c.bf16 %v829, %v829
    %v832 = vpack.c.bf16 %v830, %v830
    %v833 = vld [vmem:[#allocation13] sm:$0xff]
    %v834 = vld [vmem:[#allocation13 + $0x8] sm:$0xff]
    %v835 = vld [vmem:[#allocation13 + $0x10] sm:$0xff]
    %v836 = vld [vmem:[#allocation13 + $0x18] sm:$0xff]
    %v837 = vld [vmem:[#allocation13 + $0x20] sm:$0xff]
    %v838 = vld [vmem:[#allocation13 + $0x28] sm:$0xff]
    %v839 = vld [vmem:[#allocation13 + $0x30] sm:$0xff]
    %v840 = vld [vmem:[#allocation13 + $0x38] sm:$0xff]
    %v841 = vld [vmem:[#allocation13 + $0x40] sm:$0xff]
    %v842 = vld [vmem:[#allocation13 + $0x48] sm:$0xff]
    %v843 = vld [vmem:[#allocation13 + $0x50] sm:$0xff]
    %v844 = vld [vmem:[#allocation13 + $0x58] sm:$0xff]
    %v845 = vld [vmem:[#allocation13 + $0x60] sm:$0xff]
    %v846 = vld [vmem:[#allocation13 + $0x68] sm:$0xff]
    %v847 = vld [vmem:[#allocation13 + $0x70] sm:$0xff]
    %v848 = vld [vmem:[#allocation13 + $0x78] sm:$0xff]
    %v849 = vld [vmem:[#allocation13 + $0x80] sm:$0xff]
    %v850 = vld [vmem:[#allocation13 + $0x88] sm:$0xff]
    %v851 = vld [vmem:[#allocation13 + $0x90] sm:$0xff]
    %v852 = vld [vmem:[#allocation13 + $0x98] sm:$0xff]
    %v853 = vld [vmem:[#allocation13 + $0xa0] sm:$0xff]
    %v854 = vld [vmem:[#allocation13 + $0xa8] sm:$0xff]
    %v855 = vld [vmem:[#allocation13 + $0xb0] sm:$0xff]
    %v856 = vld [vmem:[#allocation13 + $0xb8] sm:$0xff]
    %v857 = vld [vmem:[#allocation13 + $0xc0] sm:$0xff]
    %v858 = vld [vmem:[#allocation13 + $0xc8] sm:$0xff]
    %v859 = vld [vmem:[#allocation13 + $0xd0] sm:$0xff]
    %v860 = vld [vmem:[#allocation13 + $0xd8] sm:$0xff]
    %v861 = vld [vmem:[#allocation13 + $0xe0] sm:$0xff]
    %v862 = vld [vmem:[#allocation13 + $0xe8] sm:$0xff]
    %v863 = vld [vmem:[#allocation13 + $0xf0] sm:$0xff]
    %v864 = vld [vmem:[#allocation13 + $0xf8] sm:$0xff]
    %v865 = vld [vmem:[%s10] sm:$0x3]
    %v867 = vperm.slane %v865, 0
    %v868 = vperm.slane %v865, 1
    %v903 = vunpack.c.l.b16 %v833
    %v904 = vunpack.c.h.b16 %v833
    %v905 = vunpack.c.l.b16 %v834
    %v906 = vunpack.c.h.b16 %v834
    %v907 = vunpack.c.l.b16 %v835
    %v908 = vunpack.c.h.b16 %v835
    %v909 = vunpack.c.l.b16 %v836
    %v910 = vunpack.c.h.b16 %v836
    %v911 = vunpack.c.l.b16 %v837
    %v912 = vunpack.c.h.b16 %v837
    %v913 = vunpack.c.l.b16 %v838
    %v914 = vunpack.c.h.b16 %v838
    %v915 = vunpack.c.l.b16 %v839
    %v916 = vunpack.c.h.b16 %v839
    %v917 = vunpack.c.l.b16 %v840
    %v918 = vunpack.c.h.b16 %v840
    %v919 = vunpack.c.l.b16 %v841
    %v920 = vunpack.c.h.b16 %v841
    %v921 = vunpack.c.l.b16 %v842
    %v922 = vunpack.c.h.b16 %v842
    %v923 = vunpack.c.l.b16 %v843
    %v924 = vunpack.c.h.b16 %v843
    %v925 = vunpack.c.l.b16 %v844
    %v926 = vunpack.c.h.b16 %v844
    %v927 = vunpack.c.l.b16 %v845
    %v928 = vunpack.c.h.b16 %v845
    %v929 = vunpack.c.l.b16 %v846
    %v930 = vunpack.c.h.b16 %v846
    %v931 = vunpack.c.l.b16 %v847
    %v932 = vunpack.c.h.b16 %v847
    %v933 = vunpack.c.l.b16 %v848
    %v934 = vunpack.c.h.b16 %v848
    %v935 = vunpack.c.l.b16 %v849
    %v936 = vunpack.c.h.b16 %v849
    %v937 = vunpack.c.l.b16 %v850
    %v938 = vunpack.c.h.b16 %v850
    %v939 = vunpack.c.l.b16 %v851
    %v940 = vunpack.c.h.b16 %v851
    %v941 = vunpack.c.l.b16 %v852
    %v942 = vunpack.c.h.b16 %v852
    %v943 = vunpack.c.l.b16 %v853
    %v944 = vunpack.c.h.b16 %v853
    %v945 = vunpack.c.l.b16 %v854
    %v946 = vunpack.c.h.b16 %v854
    %v947 = vunpack.c.l.b16 %v855
    %v948 = vunpack.c.h.b16 %v855
    %v949 = vunpack.c.l.b16 %v856
    %v950 = vunpack.c.h.b16 %v856
    %v951 = vunpack.c.l.b16 %v857
    %v952 = vunpack.c.h.b16 %v857
    %v953 = vunpack.c.l.b16 %v858
    %v954 = vunpack.c.h.b16 %v858
    %v955 = vunpack.c.l.b16 %v859
    %v956 = vunpack.c.h.b16 %v859
    %v957 = vunpack.c.l.b16 %v860
    %v958 = vunpack.c.h.b16 %v860
    %v959 = vunpack.c.l.b16 %v861
    %v960 = vunpack.c.h.b16 %v861
    %v961 = vunpack.c.l.b16 %v862
    %v962 = vunpack.c.h.b16 %v862
    %v963 = vunpack.c.l.b16 %v863
    %v964 = vunpack.c.h.b16 %v863
    %v965 = vunpack.c.l.b16 %v864
    %v966 = vunpack.c.h.b16 %v864
    %v967 = vpack.c.b16 %v905, %v903
    %v968 = vpack.c.b16 %v906, %v904
    %v969 = vpack.c.b16 %v909, %v907
    %v970 = vpack.c.b16 %v910, %v908
    %v971 = vpack.c.b16 %v913, %v911
    %v972 = vpack.c.b16 %v914, %v912
    %v973 = vpack.c.b16 %v917, %v915
    %v974 = vpack.c.b16 %v918, %v916
    %v975 = vpack.c.b16 %v921, %v919
    %v976 = vpack.c.b16 %v922, %v920
    %v977 = vpack.c.b16 %v925, %v923
    %v978 = vpack.c.b16 %v926, %v924
    %v979 = vpack.c.b16 %v929, %v927
    %v980 = vpack.c.b16 %v930, %v928
    %v981 = vpack.c.b16 %v933, %v931
    %v982 = vpack.c.b16 %v934, %v932
    %v983 = vpack.c.b16 %v937, %v935
    %v984 = vpack.c.b16 %v938, %v936
    %v985 = vpack.c.b16 %v941, %v939
    %v986 = vpack.c.b16 %v942, %v940
    %v987 = vpack.c.b16 %v945, %v943
    %v988 = vpack.c.b16 %v946, %v944
    %v989 = vpack.c.b16 %v949, %v947
    %v990 = vpack.c.b16 %v950, %v948
    %v991 = vpack.c.b16 %v953, %v951
    %v992 = vpack.c.b16 %v954, %v952
    %v993 = vpack.c.b16 %v957, %v955
    %v994 = vpack.c.b16 %v958, %v956
    %v995 = vpack.c.b16 %v961, %v959
    %v996 = vpack.c.b16 %v962, %v960
    %v997 = vpack.c.b16 %v965, %v963
    %v998 = vpack.c.b16 %v966, %v964
    %1031 = vmatpush.bf16.msra.mxu0 %v981
    %1032 = vmatpush.bf16.msra.mxu0 %v979
    %1033 = vmatpush.bf16.msra.mxu0 %v977
    %1034 = vmatpush.bf16.msra.mxu0 %v975
    %1035 = vmatpush.bf16.msra.mxu0 %v973
    %1036 = vmatpush.bf16.msra.mxu0 %v971
    %1037 = vmatpush.bf16.msra.mxu0 %v969
    %1038 = vmatpush.bf16.msra.mxu0 %v967
    %1039 = vmatmul.bf16.gmra.mxu0 %v831
    %v1040 = vpop.f32.mrf.mxu0
    %v1041 = vadd.f32 %v867, %v1040
    %v1042 = vpop.f32.mrf.mxu0
    %1043 = vdwg.mxu0
    %1044 = vmatpush.bf16.msra.mxu0 %v997
    %1045 = vmatpush.bf16.msra.mxu0 %v995
    %1046 = vmatpush.bf16.msra.mxu0 %v993
    %1047 = vmatpush.bf16.msra.mxu0 %v991
    %1048 = vmatpush.bf16.msra.mxu0 %v989
    %1049 = vmatpush.bf16.msra.mxu0 %v987
    %1050 = vmatpush.bf16.msra.mxu0 %v985
    %1051 = vmatpush.bf16.msra.mxu0 %v983
    %1052 = vmatmul.bf16.gmra.mxu0 %v832
    %v1053 = vpop.f32.mrf.mxu0
    %v1054 = vadd.f32 %v1041, %v1053
    %v1055 = vpop.f32.mrf.mxu0
    %1056 = vdwg.mxu0
    %1057 = vmatpush.bf16.msra.mxu0 %v982
    %1058 = vmatpush.bf16.msra.mxu0 %v980
    %1059 = vmatpush.bf16.msra.mxu0 %v978
    %1060 = vmatpush.bf16.msra.mxu0 %v976
    %1061 = vmatpush.bf16.msra.mxu0 %v974
    %1062 = vmatpush.bf16.msra.mxu0 %v972
    %1063 = vmatpush.bf16.msra.mxu0 %v970
    %1064 = vmatpush.bf16.msra.mxu0 %v968
    %1065 = vmatmul.bf16.gmra.mxu0 %v831
    %v1066 = vpop.f32.mrf.mxu0
    %v1067 = vadd.f32 %v868, %v1066
    %v1068 = vpop.f32.mrf.mxu0
    %1069 = vdwg.mxu0
    %1070 = vmatpush.bf16.msra.mxu0 %v998
    %1071 = vmatpush.bf16.msra.mxu0 %v996
    %1072 = vmatpush.bf16.msra.mxu0 %v994
    %1073 = vmatpush.bf16.msra.mxu0 %v992
    %1074 = vmatpush.bf16.msra.mxu0 %v990
    %1075 = vmatpush.bf16.msra.mxu0 %v988
    %1076 = vmatpush.bf16.msra.mxu0 %v986
    %1077 = vmatpush.bf16.msra.mxu0 %v984
    %1078 = vmatmul.bf16.gmra.mxu0 %v832
    %v1079 = vpop.f32.mrf.mxu0
    %v1080 = vadd.f32 %v1067, %v1079
    %v1081 = vpop.f32.mrf.mxu0
    %1082 = vdwg.mxu0
    %1083 = vst [vmem:[#allocation14] sm:$0xff] %v1054
    %1084 = vst [vmem:[#allocation14 + $0x8] sm:$0xff] %v1080
    // Predicated region
    $region74: #{tpu_custom_call.1} parent=1 // pred_check
      _
    $region75: #{tpu_custom_call.1} parent=1 // pred_check_branch
      %1086 = sbr.rel (0) target = $region77
    $region76: #{tpu_custom_call.1} parent=1 // pred_region
      %1088 = vsyncadd [#allocation4], 0
      %s1090 = sshll.u32 [#allocation14], 4
      %s1091 = int_to_ptr.vmem [resolvable:$true] %s1090
      %s1092 = sshll.u32 %s11, 4
      %s1093 = int_to_ptr.hbm [resolvable:$true] %s1092
      %1095 = dma.vmem_to_hbm [thread:$0]  %s1091, 256, %s1093, [#allocation4]
    $region77: #{tpu_custom_call.1} parent=1 // pred_fallthru
      _
    // Predicated region
    $region78: #{tpu_custom_call.1} parent=1 // pred_check
      _
    $region79: #{tpu_custom_call.1} parent=1 // pred_check_branch
      %1097 = sbr.rel (0) target = $region81
    $region80: #{tpu_custom_call.1} parent=1 // pred_region
      %1099 = dma.done [#allocation4], 256
    $region81: #{tpu_custom_call.1} parent=1 // pred_fallthru
      _
    %1100 = vsyncpa [#allocation3], 1
    %1101 = vsyncpa [#allocation6], 1
    %1102 = vsyncpa [#allocation9], 1
    %1103 = vsyncpa [#allocation12], 1
    %1104 = vsyncpa [#allocation4], 1

</llo_original>
